<compile_context>
chip_gen: v5e
topology: v5e:2x2
jax: 0.10.0
libtpu: 0.0.40
codegen_flags: <defaults>
</compile_context>

<pallas_src>
import math

import jax
import jax.numpy as jnp
from jax.experimental import pallas as pl
from jax.experimental.pallas import tpu as pltpu


# ------------------------------- kernel -------------------------------------

def _make_fused_gcn_kernel(num_layers):
    """Fused num_layers-deep GCN encoder over one (Bp, N, ...) batch block.

    Ref layout:
      x_ref:   (Bp, N, F_in)   f32
      adj_ref: (Bp, N, N)      f32
      per layer l: w_ref (F_in_l, F_out_l) bf16, b_ref (1, F_out_l) f32
      o_ref:   (Bp, N, hidden) f32  (unpadded store)
    """

    def kernel(x_ref, adj_ref, *rest):
        o_ref = rest[-1]
        wb_refs = rest[:-1]

        bp, n, _ = x_ref.shape
        adj = adj_ref[...]                     # (Bp, N, N) f32 (kept f32)
        h = x_ref[...]                         # (Bp, N, F_in) f32

        for l in range(num_layers):
            w = wb_refs[2 * l][...]            # (f_in, f_out) bf16
            b = wb_refs[2 * l + 1][...]        # (1, f_out)    f32
            f_in, f_out = w.shape

            if f_in <= f_out:
                # (adj @ h) @ W : cheaper when the input width is narrower.
                t = jnp.einsum("bnk,bkf->bnf", adj, h,
                               preferred_element_type=jnp.float32)
                s = jnp.dot(t.reshape(bp * n, f_in).astype(jnp.bfloat16), w,
                            preferred_element_type=jnp.float32)
                s = s.reshape(bp, n, f_out)
            else:
                # adj @ (h @ W)
                t = jnp.dot(h.reshape(bp * n, f_in).astype(jnp.bfloat16), w,
                            preferred_element_type=jnp.float32)
                s = jnp.einsum("bnk,bkf->bnf", adj, t.reshape(bp, n, f_out),
                               preferred_element_type=jnp.float32)

            h = jnp.maximum(s + b, 0.0)        # f32 bias + ReLU on the VPU

        o_ref[...] = h.astype(o_ref.dtype)     # unpadded (Bp, N, hidden) store

    return kernel


# ------------------------------- wrapper -------------------------------------

def prepare_gcn_params(params):
    """ONE-TIME parameter prep (outside the per-call forward path):
    cast weights to bf16, reshape biases to (1, out) f32."""
    prepped = []
    for w, b in params:
        prepped.append((jnp.asarray(w, jnp.bfloat16),
                        jnp.asarray(b, jnp.float32).reshape(1, -1)))
    return prepped


def _tensorcores_per_device():
    """2 TensorCores per chip on v7x, 1 on v5e/v6e (conservative fallback 1)."""
    try:
        kind = jax.devices()[0].device_kind.lower()
    except Exception:
        return 1
    return 2 if "v7" in kind else 1


def gcn_encoder_forward(x, adj, prepped_params):
    """Fused Pallas forward of GCNEncoder: x = relu(adj @ (x @ W_l) + b_l)."""
    B, N, F_in = x.shape
    num_layers = len(prepped_params)
    hidden = prepped_params[-1][0].shape[1]

    # Collapse the batch grid on single-TC chips (v5e/v6e): one grid step,
    # B folded into the matmul rows.  Keep grid=(B,) "parallel" on v7x so the
    # batch shards 1:1 onto its two TensorCores.
    tc = _tensorcores_per_device()
    g = tc if (tc > 1 and B % tc == 0) else 1
    bp = B // g

    in_specs = [
        pl.BlockSpec((bp, N, F_in), lambda i: (i, 0, 0)),
        pl.BlockSpec((bp, N, N), lambda i: (i, 0, 0)),
    ]
    flat_params = []
    for w, b in prepped_params:
        flat_params += [w, b]
        in_specs += [
            pl.BlockSpec(w.shape, lambda i: (0, 0)),   # grid-invariant weight
            pl.BlockSpec(b.shape, lambda i: (0, 0)),   # grid-invariant bias
        ]

    return pl.pallas_call(
        _make_fused_gcn_kernel(num_layers),
        out_shape=jax.ShapeDtypeStruct((B, N, hidden), jnp.float32),
        grid_spec=pltpu.PrefetchScalarGridSpec(
            num_scalar_prefetch=0,
            grid=(g,),
            in_specs=in_specs,
            out_specs=pl.BlockSpec((bp, N, hidden), lambda i: (i, 0, 0)),
        ),
        compiler_params=pltpu.CompilerParams(
            dimension_semantics=("parallel",),
        ),
    )(x, adj, *flat_params)


# ----------------------------- parameter init --------------------------------

def xavier_uniform(key, fan_in, fan_out):
    bound = math.sqrt(6.0 / (fan_in + fan_out))
    return jax.random.uniform(key, (fan_in, fan_out), dtype=jnp.float32,
                              minval=-bound, maxval=bound)


def init_gcn_encoder_params(key, in_features, hidden_size, num_layers=2):
    """Deterministic parameter init matching GCNEncoder.__init__."""
    params = []
    dims_in = [in_features] + [hidden_size] * (num_layers - 1)
    for f_in in dims_in:
        key, wkey = jax.random.split(key)
        w = xavier_uniform(wkey, f_in, hidden_size)
        b = jnp.zeros((hidden_size,), dtype=jnp.float32)
        params.append((w, b))
    return params


def gcn_encoder_reference(x, adj, params):
    """Pure-JAX f32 reference matching the PyTorch module."""
    h = x
    for (w, b) in params:
        support = jnp.matmul(h, w)
        out = jnp.matmul(adj, support) + b.reshape(1, 1, -1)
        h = jax.nn.relu(out)
    return h


if __name__ == "__main__":
    B = 2           # batch
    N = 16          # number of graph nodes
    IN_FEATURES = 8
    HIDDEN = 32
    NUM_LAYERS = 2

    key = jax.random.PRNGKey(0)
    kx, kadj, kparams = jax.random.split(key, 3)

    x = jax.random.normal(kx, (B, N, IN_FEATURES), dtype=jnp.float32)

    # Symmetric, row-normalized adjacency (deterministic).
    a_raw = jax.random.uniform(kadj, (B, N, N), dtype=jnp.float32)
    a_sym = 0.5 * (a_raw + jnp.swapaxes(a_raw, -1, -2)) + jnp.eye(N)[None]
    adj = a_sym / jnp.sum(a_sym, axis=-1, keepdims=True)

    params = init_gcn_encoder_params(kparams, IN_FEATURES, HIDDEN, NUM_LAYERS)
    prepped = prepare_gcn_params(params)   # one-time prep, outside the fwd path

    out = gcn_encoder_forward(x, adj, prepped)
    out = jax.block_until_ready(out)

    ref = gcn_encoder_reference(x, adj, params)
    assert out.shape == (B, N, HIDDEN)
    # Loose tolerance: the feature matmul uses bf16 inputs (f32 accumulation);
    # the adjacency matmul stays f32.
    assert jnp.allclose(out, ref, atol=3e-2, rtol=3e-2), "mismatch vs JAX reference"

    print("KERNEL_OK")
</pallas_src>

<mosaic_0001>
module attributes {stable_mosaic.version = 11 : i64} {
  func.func @kernel(%arg0: i32, %arg1: memref<2x16x8xf32, #tpu.memory_space<vmem>>, %arg2: memref<2x16x16xf32, #tpu.memory_space<vmem>>, %arg3: memref<8x32xbf16, #tpu.memory_space<vmem>>, %arg4: memref<1x32xf32, #tpu.memory_space<vmem>>, %arg5: memref<32x32xbf16, #tpu.memory_space<vmem>>, %arg6: memref<1x32xf32, #tpu.memory_space<vmem>>, %arg7: memref<2x16x32xf32, #tpu.memory_space<vmem>>) attributes {dimension_semantics = [#tpu.dimension_semantics<parallel>], iteration_bounds = array<i64: 1>, scalar_prefetch = 0 : i64, scratch_operands = 0 : i64, tpu.core_type = #tpu.core_type<tc>, window_params = [{transform_indices = @transform_0, window_bounds = array<i64: 2, 16, 8>}, {transform_indices = @transform_1, window_bounds = array<i64: 2, 16, 16>}, {pipeline_mode = #tpu.pipeline_mode<synchronous>, transform_indices = @transform_2, window_bounds = array<i64: 8, 32>}, {pipeline_mode = #tpu.pipeline_mode<synchronous>, transform_indices = @transform_3, window_bounds = array<i64: 1, 32>}, {pipeline_mode = #tpu.pipeline_mode<synchronous>, transform_indices = @transform_4, window_bounds = array<i64: 32, 32>}, {pipeline_mode = #tpu.pipeline_mode<synchronous>, transform_indices = @transform_5, window_bounds = array<i64: 1, 32>}, {transform_indices = @transform_6, window_bounds = array<i64: 2, 16, 32>}]} {
    %c0 = arith.constant 0 : index
    %c0_0 = arith.constant 0 : index
    %c0_1 = arith.constant 0 : index
    %0 = vector.load %arg2[%c0, %c0_0, %c0_1] : memref<2x16x16xf32, #tpu.memory_space<vmem>>, vector<2x16x16xf32>
    %c0_2 = arith.constant 0 : index
    %c0_3 = arith.constant 0 : index
    %c0_4 = arith.constant 0 : index
    %1 = vector.load %arg1[%c0_2, %c0_3, %c0_4] : memref<2x16x8xf32, #tpu.memory_space<vmem>>, vector<2x16x8xf32>
    %c0_5 = arith.constant 0 : index
    %c0_6 = arith.constant 0 : index
    %2 = vector.load %arg3[%c0_5, %c0_6] : memref<8x32xbf16, #tpu.memory_space<vmem>>, vector<8x32xbf16>
    %c0_7 = arith.constant 0 : index
    %c0_8 = arith.constant 0 : index
    %3 = vector.load %arg4[%c0_7, %c0_8] : memref<1x32xf32, #tpu.memory_space<vmem>>, vector<1x32xf32>
    "tpu.trace_start"() <{level = 10 : i32, message = "bnk,bkf->bnf"}> : () -> ()
    %cst = arith.constant dense<0.000000e+00> : vector<2x16x8xf32>
    %4 = tpu.matmul %0, %1, %cst {dimension_numbers = #tpu.dot_dimension_numbers<[2], [1], [1], [2], [0, 0, 0, 1, 1, 2], [0], [0]>} : vector<2x16x16xf32>, vector<2x16x8xf32>, vector<2x16x8xf32> -> vector<2x16x8xf32>
    "tpu.trace_stop"() : () -> ()
    %5 = vector.shape_cast %4 : vector<2x16x8xf32> to vector<32x8xf32>
    %6 = arith.truncf %5 : vector<32x8xf32> to vector<32x8xbf16>
    %cst_9 = arith.constant dense<0.000000e+00> : vector<32x32xf32>
    %7 = tpu.matmul %6, %2, %cst_9 {dimension_numbers = #tpu.dot_dimension_numbers<[1], [0], [0], [1], [0, 0, 1, 1], [], []>} : vector<32x8xbf16>, vector<8x32xbf16>, vector<32x32xf32> -> vector<32x32xf32>
    %8 = vector.shape_cast %7 : vector<32x32xf32> to vector<2x16x32xf32>
    %9 = vector.shape_cast %3 : vector<1x32xf32> to vector<1x1x32xf32>
    %10 = vector.broadcast %9 : vector<1x1x32xf32> to vector<2x16x32xf32>
    %11 = arith.addf %8, %10 : vector<2x16x32xf32>
    %cst_10 = arith.constant 0.000000e+00 : f32
    %12 = vector.broadcast %cst_10 : f32 to vector<2x16x32xf32>
    %13 = arith.maximumf %11, %12 : vector<2x16x32xf32>
    %c0_11 = arith.constant 0 : index
    %c0_12 = arith.constant 0 : index
    %14 = vector.load %arg5[%c0_11, %c0_12] : memref<32x32xbf16, #tpu.memory_space<vmem>>, vector<32x32xbf16>
    %c0_13 = arith.constant 0 : index
    %c0_14 = arith.constant 0 : index
    %15 = vector.load %arg6[%c0_13, %c0_14] : memref<1x32xf32, #tpu.memory_space<vmem>>, vector<1x32xf32>
    "tpu.trace_start"() <{level = 10 : i32, message = "bnk,bkf->bnf"}> : () -> ()
    %cst_15 = arith.constant dense<0.000000e+00> : vector<2x16x32xf32>
    %16 = tpu.matmul %0, %13, %cst_15 {dimension_numbers = #tpu.dot_dimension_numbers<[2], [1], [1], [2], [0, 0, 0, 1, 1, 2], [0], [0]>} : vector<2x16x16xf32>, vector<2x16x32xf32>, vector<2x16x32xf32> -> vector<2x16x32xf32>
    "tpu.trace_stop"() : () -> ()
    %17 = vector.shape_cast %16 : vector<2x16x32xf32> to vector<32x32xf32>
    %18 = arith.truncf %17 : vector<32x32xf32> to vector<32x32xbf16>
    %cst_16 = arith.constant dense<0.000000e+00> : vector<32x32xf32>
    %19 = tpu.matmul %18, %14, %cst_16 {dimension_numbers = #tpu.dot_dimension_numbers<[1], [0], [0], [1], [0, 0, 1, 1], [], []>} : vector<32x32xbf16>, vector<32x32xbf16>, vector<32x32xf32> -> vector<32x32xf32>
    %20 = vector.shape_cast %19 : vector<32x32xf32> to vector<2x16x32xf32>
    %21 = vector.shape_cast %15 : vector<1x32xf32> to vector<1x1x32xf32>
    %22 = vector.broadcast %21 : vector<1x1x32xf32> to vector<2x16x32xf32>
    %23 = arith.addf %20, %22 : vector<2x16x32xf32>
    %cst_17 = arith.constant 0.000000e+00 : f32
    %24 = vector.broadcast %cst_17 : f32 to vector<2x16x32xf32>
    %25 = arith.maximumf %23, %24 : vector<2x16x32xf32>
    %c0_18 = arith.constant 0 : index
    %c0_19 = arith.constant 0 : index
    %c0_20 = arith.constant 0 : index
    %26 = vector.load %arg7[%c0_18, %c0_19, %c0_20] : memref<2x16x32xf32, #tpu.memory_space<vmem>>, vector<2x16x32xf32>
    tpu.vector_store %arg7[%c0_18, %c0_19, %c0_20], %25 {strides = array<i32>} : memref<2x16x32xf32, #tpu.memory_space<vmem>>, vector<2x16x32xf32>,
    return
  }
  func.func @transform_0(%arg0: i32) -> (i32, i32, i32) {
    %c0_i32 = arith.constant 0 : i32
    %c0_i32_0 = arith.constant 0 : i32
    %c0_i32_1 = arith.constant 0 : i32
    return %arg0, %c0_i32, %c0_i32_0 : i32, i32, i32
  }
  func.func @transform_1(%arg0: i32) -> (i32, i32, i32) {
    %c0_i32 = arith.constant 0 : i32
    %c0_i32_0 = arith.constant 0 : i32
    %c0_i32_1 = arith.constant 0 : i32
    return %arg0, %c0_i32, %c0_i32_0 : i32, i32, i32
  }
  func.func @transform_2(%arg0: i32) -> (i32, i32) {
    %c0_i32 = arith.constant 0 : i32
    %c0_i32_0 = arith.constant 0 : i32
    %c0_i32_1 = arith.constant 0 : i32
    return %c0_i32, %c0_i32_0 : i32, i32
  }
  func.func @transform_3(%arg0: i32) -> (i32, i32) {
    %c0_i32 = arith.constant 0 : i32
    %c0_i32_0 = arith.constant 0 : i32
    %c0_i32_1 = arith.constant 0 : i32
    return %c0_i32, %c0_i32_0 : i32, i32
  }
  func.func @transform_4(%arg0: i32) -> (i32, i32) {
    %c0_i32 = arith.constant 0 : i32
    %c0_i32_0 = arith.constant 0 : i32
    %c0_i32_1 = arith.constant 0 : i32
    return %c0_i32, %c0_i32_0 : i32, i32
  }
  func.func @transform_5(%arg0: i32) -> (i32, i32) {
    %c0_i32 = arith.constant 0 : i32
    %c0_i32_0 = arith.constant 0 : i32
    %c0_i32_1 = arith.constant 0 : i32
    return %c0_i32, %c0_i32_0 : i32, i32
  }
  func.func @transform_6(%arg0: i32) -> (i32, i32, i32) {
    %c0_i32 = arith.constant 0 : i32
    %c0_i32_0 = arith.constant 0 : i32
    %c0_i32_1 = arith.constant 0 : i32
    return %arg0, %c0_i32, %c0_i32_0 : i32, i32, i32
  }
}

</mosaic_0001>

<llo_original>
// kernel: tpu_custom_call.1
$region0: #{tpu_custom_call.1}
  #allocation0 [shape = 'u32[]', space=smem, size = 0x4, offset = 0x4, fixed_abs, tag = 'smem constant byte address 0x4 - core index']
  #allocation1 [shape = 'u32[72,128]{1,0:T(1,128)}', space=vmem, size = 0x9000, scoped, tag = 'internal scratch']
  %s0 = inlined_call_operand.vmem [shape: f32[2,16,8], index: 0, kind: input, shape index: {}]
  %s1 = inlined_call_operand.vmem [shape: f32[2,16,16], index: 1, kind: input, shape index: {}]
  %s2 = inlined_call_operand.hbm [shape: bf16[8,32], index: 2, kind: input, shape index: {}]
  %s3 = inlined_call_operand.vmem [shape: f32[1,32], index: 3, kind: input, shape index: {}]
  %s4 = inlined_call_operand.vmem [shape: bf16[32,32], index: 4, kind: input, shape index: {}]
  %s5 = inlined_call_operand.vmem [shape: f32[1,32], index: 5, kind: input, shape index: {}]
  %s6 = inlined_call_operand.hbm [shape: f32[2,16,32], index: 6, kind: output, shape index: {}]
  %s7 = sld [smem:[#allocation0]]
  $region38: #{tpu_custom_call.1} parent=0
    _
  %s9 = ssub.s32 1, %s7
  %s10 = scalar_select 0, %s9, %s7
  $region1: #{tpu_custom_call.1} parent=0
    #allocation2 [shape = 'u8[2048]{0}', space=vmem, size = 0x800, scoped, tag = 'input window, operand 2, single buffered']
    #allocation3 [shape = 's32[1]{0}', space=sflag, size = 0x4, scoped, tag = 'scoped memory for tpu_custom_call.1']
    #allocation4 [shape = 's32[1]{0}', space=sflag, size = 0x4, scoped, tag = 'scoped memory for tpu_custom_call.1']
    #allocation5 [shape = 'u8[16384]{0}', space=vmem, size = 0x4000, scoped, tag = 'output window, operand 0, single buffered']
    %11 = vsyncpa [#allocation3], 0
    %12 = vsyncpa [#allocation4], 0
    // Predicated region
    $region2: #{tpu_custom_call.1} parent=1 // pred_check
      _
    $region3: #{tpu_custom_call.1} parent=1 // pred_check_branch
      %14 = sbr.rel (0) target = $region5
    $region4: #{tpu_custom_call.1} parent=1 // pred_region
      _
    $region5: #{tpu_custom_call.1} parent=1 // pred_fallthru
      _
    // Predicated region
    $region6: #{tpu_custom_call.1} parent=1 // pred_check
      _
    $region7: #{tpu_custom_call.1} parent=1 // pred_check_branch
      %16 = sbr.rel (0) target = $region9
    $region8: #{tpu_custom_call.1} parent=1 // pred_region
      _
    $region9: #{tpu_custom_call.1} parent=1 // pred_fallthru
      _
    // Predicated region
    $region10: #{tpu_custom_call.1} parent=1 // pred_check
      _
    $region11: #{tpu_custom_call.1} parent=1 // pred_check_branch
      %18 = sbr.rel (0) target = $region13
    $region12: #{tpu_custom_call.1} parent=1 // pred_region
      %20 = vsyncadd [#allocation3], 0
      %s22 = sshll.u32 %s2, 4
      %s23 = int_to_ptr.hbm [resolvable:$true] %s22
      %s24 = sshll.u32 [#allocation2], 4
      %s25 = int_to_ptr.vmem [resolvable:$true] %s24
      %27 = dma.hbm_to_vmem [thread:$0]  %s23, 64, %s25, [#allocation3]
    $region13: #{tpu_custom_call.1} parent=1 // pred_fallthru
      _
    // Predicated region
    $region14: #{tpu_custom_call.1} parent=1 // pred_check
      _
    $region15: #{tpu_custom_call.1} parent=1 // pred_check_branch
      %29 = sbr.rel (0) target = $region17
    $region16: #{tpu_custom_call.1} parent=1 // pred_region
      _
    $region17: #{tpu_custom_call.1} parent=1 // pred_fallthru
      _
    // Predicated region
    $region18: #{tpu_custom_call.1} parent=1 // pred_check
      _
    $region19: #{tpu_custom_call.1} parent=1 // pred_check_branch
      %31 = sbr.rel (0) target = $region21
    $region20: #{tpu_custom_call.1} parent=1 // pred_region
      _
    $region21: #{tpu_custom_call.1} parent=1 // pred_fallthru
      _
    // Predicated region
    $region22: #{tpu_custom_call.1} parent=1 // pred_check
      _
    $region23: #{tpu_custom_call.1} parent=1 // pred_check_branch
      %33 = sbr.rel (0) target = $region25
    $region24: #{tpu_custom_call.1} parent=1 // pred_region
      _
    $region25: #{tpu_custom_call.1} parent=1 // pred_fallthru
      _
    // Predicated region
    $region26: #{tpu_custom_call.1} parent=1 // pred_check
      _
    $region27: #{tpu_custom_call.1} parent=1 // pred_check_branch
      %35 = sbr.rel (0) target = $region29
    $region28: #{tpu_custom_call.1} parent=1 // pred_region
      %37 = dma.done [#allocation3], 64
    $region29: #{tpu_custom_call.1} parent=1 // pred_fallthru
      _
    %v39 = vld [vmem:[%s1] sm:$0xff]
    %v40 = vld [vmem:[%s1 + $0x8] sm:$0xff]
    %v41 = vld [vmem:[%s1 + $0x10] sm:$0xff]
    %v42 = vld [vmem:[%s1 + $0x18] sm:$0xff]
    %v43 = vld [vmem:[%s0] sm:$0xff]
    %v44 = vld [vmem:[%s0 + $0x8] sm:$0xff]
    %v45 = vld [vmem:[%s0 + $0x10] sm:$0xff]
    %v46 = vld [vmem:[%s0 + $0x18] sm:$0xff]
    %v47 = vld [vmem:[#allocation2] sm:$0xf]
    %v48 = vld [vmem:[%s3] sm:$0x1]
    %vm49 = vcmask 130048
    %v51 = vsel %vm49, %v39, 0
    %v54 = vsel %vm49, %v40, 0
    %56 = vmatpush.msra.mxu0 0.0
    %57 = vmatpush.msra.mxu0 0.0
    %58 = vmatpush.msra.mxu0 0.0
    %59 = vmatpush.msra.mxu0 0.0
    %60 = vmatpush.msra.mxu0 0.0
    %61 = vmatpush.msra.mxu0 0.0
    %62 = vmatpush.msra.mxu0 0.0
    %63 = vmatpush.msra.mxu0 0.0
    %64 = vmatpush.msra.mxu0 0.0
    %65 = vmatpush.msra.mxu0 0.0
    %66 = vmatpush.msra.mxu0 0.0
    %67 = vmatpush.msra.mxu0 0.0
    %68 = vmatpush.msra.mxu0 0.0
    %69 = vmatpush.msra.mxu0 0.0
    %70 = vmatpush.msra.mxu0 %v44
    %71 = vmatpush.msra.mxu0 %v43
    %72 = vmatmul.f32.gmra.mxu0 %v51
    %v73 = vpop.f32.mrf.mxu0
    %v74 = vadd.f32 0.0, %v73
    %75 = vmatmul.f32.gmra.mxu0 %v54
    %v76 = vpop.f32.mrf.mxu0
    %v77 = vadd.f32 0.0, %v76
    %78 = vdwg.mxu0
    %v80 = vsel %vm49, %v41, 0
    %v83 = vsel %vm49, %v42, 0
    %85 = vmatpush.msra.mxu0 0.0
    %86 = vmatpush.msra.mxu0 0.0
    %87 = vmatpush.msra.mxu0 0.0
    %88 = vmatpush.msra.mxu0 0.0
    %89 = vmatpush.msra.mxu0 0.0
    %90 = vmatpush.msra.mxu0 0.0
    %91 = vmatpush.msra.mxu0 0.0
    %92 = vmatpush.msra.mxu0 0.0
    %93 = vmatpush.msra.mxu0 0.0
    %94 = vmatpush.msra.mxu0 0.0
    %95 = vmatpush.msra.mxu0 0.0
    %96 = vmatpush.msra.mxu0 0.0
    %97 = vmatpush.msra.mxu0 0.0
    %98 = vmatpush.msra.mxu0 0.0
    %99 = vmatpush.msra.mxu0 %v46
    %100 = vmatpush.msra.mxu0 %v45
    %101 = vmatmul.f32.gmra.mxu0 %v80
    %v102 = vpop.f32.mrf.mxu0
    %v103 = vadd.f32 0.0, %v102
    %104 = vmatmul.f32.gmra.mxu0 %v83
    %v105 = vpop.f32.mrf.mxu0
    %v106 = vadd.f32 0.0, %v105
    %107 = vdwg.mxu0
    %v108 = vpack.c.bf16 %v77, %v74
    %v109 = vpack.c.bf16 %v106, %v103
    %vm110 = vcmask 64512
    %v112 = vsel %vm110, %v108, 0
    %v115 = vsel %vm110, %v109, 0
    %vm117 = vcmask 1043456
    %v119 = vsel %vm117, %v47, 0
    %121 = vmatpush.bf16.msra.mxu0 0
    %122 = vmatpush.bf16.msra.mxu0 0
    %123 = vmatpush.bf16.msra.mxu0 0
    %124 = vmatpush.bf16.msra.mxu0 0
    %125 = vmatpush.bf16.msra.mxu0 0
    %126 = vmatpush.bf16.msra.mxu0 0
    %127 = vmatpush.bf16.msra.mxu0 0
    %128 = vmatpush.bf16.msra.mxu0 %v119
    %129 = vmatmul.bf16.gmra.mxu0 %v112
    %v130 = vpop.f32.mrf.mxu0
    %v131 = vadd.f32 0.0, %v130
    %v132 = vpop.f32.mrf.mxu0
    %v133 = vadd.f32 0.0, %v132
    %134 = vmatmul.bf16.gmra.mxu0 %v115
    %v135 = vpop.f32.mrf.mxu0
    %v136 = vadd.f32 0.0, %v135
    %v137 = vpop.f32.mrf.mxu0
    %v138 = vadd.f32 0.0, %v137
    %139 = vdwg.mxu0
    %v141 = vperm.slane %v48, 0
    %v143 = vadd.f32 %v131, %v141
    %v144 = vadd.f32 %v133, %v141
    %v145 = vadd.f32 %v136, %v141
    %v146 = vadd.f32 %v138, %v141
    %v147 = vmax.f32 %v143, 0.0
    %v148 = vmax.f32 %v144, 0.0
    %v149 = vmax.f32 %v145, 0.0
    %v150 = vmax.f32 %v146, 0.0
    %v151 = vld [vmem:[%s4] sm:$0xf]
    %v152 = vld [vmem:[%s4 + $0x4] sm:$0xf]
    %v153 = vld [vmem:[%s4 + $0x8] sm:$0xf]
    %v154 = vld [vmem:[%s4 + $0xc] sm:$0xf]
    %v155 = vld [vmem:[%s5] sm:$0x1]
    %156 = vmatpush.msra.mxu0 0.0
    %157 = vmatpush.msra.mxu0 0.0
    %158 = vmatpush.msra.mxu0 0.0
    %159 = vmatpush.msra.mxu0 0.0
    %160 = vmatpush.msra.mxu0 0.0
    %161 = vmatpush.msra.mxu0 0.0
    %162 = vmatpush.msra.mxu0 0.0
    %163 = vmatpush.msra.mxu0 0.0
    %164 = vmatpush.msra.mxu0 0.0
    %165 = vmatpush.msra.mxu0 0.0
    %166 = vmatpush.msra.mxu0 0.0
    %167 = vmatpush.msra.mxu0 0.0
    %168 = vmatpush.msra.mxu0 0.0
    %169 = vmatpush.msra.mxu0 0.0
    %170 = vmatpush.msra.mxu0 %v148
    %171 = vmatpush.msra.mxu0 %v147
    %172 = vmatmul.f32.gmra.mxu0 %v51
    %v173 = vpop.f32.mrf.mxu0
    %v174 = vadd.f32 0.0, %v173
    %175 = vmatmul.f32.gmra.mxu0 %v54
    %v176 = vpop.f32.mrf.mxu0
    %v177 = vadd.f32 0.0, %v176
    %178 = vdwg.mxu0
    %179 = vmatpush.msra.mxu0 0.0
    %180 = vmatpush.msra.mxu0 0.0
    %181 = vmatpush.msra.mxu0 0.0
    %182 = vmatpush.msra.mxu0 0.0
    %183 = vmatpush.msra.mxu0 0.0
    %184 = vmatpush.msra.mxu0 0.0
    %185 = vmatpush.msra.mxu0 0.0
    %186 = vmatpush.msra.mxu0 0.0
    %187 = vmatpush.msra.mxu0 0.0
    %188 = vmatpush.msra.mxu0 0.0
    %189 = vmatpush.msra.mxu0 0.0
    %190 = vmatpush.msra.mxu0 0.0
    %191 = vmatpush.msra.mxu0 0.0
    %192 = vmatpush.msra.mxu0 0.0
    %193 = vmatpush.msra.mxu0 %v150
    %194 = vmatpush.msra.mxu0 %v149
    %195 = vmatmul.f32.gmra.mxu0 %v80
    %v196 = vpop.f32.mrf.mxu0
    %v197 = vadd.f32 0.0, %v196
    %198 = vmatmul.f32.gmra.mxu0 %v83
    %v199 = vpop.f32.mrf.mxu0
    %v200 = vadd.f32 0.0, %v199
    %201 = vdwg.mxu0
    %v202 = vpack.c.bf16 %v177, %v174
    %v203 = vpack.c.bf16 %v200, %v197
    %v208 = vunpack.c.l.b16 %v151
    %v209 = vunpack.c.l.b16 %v152
    %v210 = vunpack.c.l.b16 %v153
    %v211 = vunpack.c.l.b16 %v154
    %v212 = vpack.c.b16 %v209, %v208
    %v213 = vpack.c.b16 %v211, %v210
    %vm216 = vcmask 261120
    %v218 = vsel %vm216, %v202, 0
    %v221 = vsel %vm216, %v203, 0
    %223 = vmatpush.bf16.msra.mxu0 0
    %224 = vmatpush.bf16.msra.mxu0 0
    %225 = vmatpush.bf16.msra.mxu0 0
    %226 = vmatpush.bf16.msra.mxu0 0
    %227 = vmatpush.bf16.msra.mxu0 0
    %228 = vmatpush.bf16.msra.mxu0 0
    %229 = vmatpush.bf16.msra.mxu0 %v213
    %230 = vmatpush.bf16.msra.mxu0 %v212
    %231 = vmatmul.bf16.gmra.mxu0 %v218
    %v232 = vpop.f32.mrf.mxu0
    %v233 = vadd.f32 0.0, %v232
    %v234 = vpop.f32.mrf.mxu0
    %v235 = vadd.f32 0.0, %v234
    %236 = vmatmul.bf16.gmra.mxu0 %v221
    %v237 = vpop.f32.mrf.mxu0
    %v238 = vadd.f32 0.0, %v237
    %v239 = vpop.f32.mrf.mxu0
    %v240 = vadd.f32 0.0, %v239
    %241 = vdwg.mxu0
    %v243 = vperm.slane %v155, 0
    %v245 = vadd.f32 %v233, %v243
    %v246 = vadd.f32 %v235, %v243
    %v247 = vadd.f32 %v238, %v243
    %v248 = vadd.f32 %v240, %v243
    %v249 = vmax.f32 %v245, 0.0
    %v250 = vmax.f32 %v246, 0.0
    %v251 = vmax.f32 %v247, 0.0
    %v252 = vmax.f32 %v248, 0.0
    %253 = vst.msk [vmem:[#allocation5] sm:$0xff] %vm216, %v249
    %254 = vst.msk [vmem:[#allocation5 + $0x8] sm:$0xff] %vm216, %v250
    %255 = vst.msk [vmem:[#allocation5 + $0x10] sm:$0xff] %vm216, %v251
    %256 = vst.msk [vmem:[#allocation5 + $0x18] sm:$0xff] %vm216, %v252
    // Predicated region
    $region30: #{tpu_custom_call.1} parent=1 // pred_check
      _
    $region31: #{tpu_custom_call.1} parent=1 // pred_check_branch
      %258 = sbr.rel (0) target = $region33
    $region32: #{tpu_custom_call.1} parent=1 // pred_region
      %260 = vsyncadd [#allocation4], 0
      %s261 = sshll.u32 [#allocation5], 4
      %s262 = int_to_ptr.vmem [resolvable:$true] %s261
      %s263 = sshll.u32 %s6, 4
      %s264 = int_to_ptr.hbm [resolvable:$true] %s263
      %269 = dma.vmem_to_hbm [thread:$0]  %s262, 512, %s264, [#allocation4], 128, 128, 8
    $region33: #{tpu_custom_call.1} parent=1 // pred_fallthru
      _
    // Predicated region
    $region34: #{tpu_custom_call.1} parent=1 // pred_check
      _
    $region35: #{tpu_custom_call.1} parent=1 // pred_check_branch
      %271 = sbr.rel (0) target = $region37
    $region36: #{tpu_custom_call.1} parent=1 // pred_region
      %273 = dma.done [#allocation4], 512
    $region37: #{tpu_custom_call.1} parent=1 // pred_fallthru
      _
    %274 = vsyncpa [#allocation3], 1
    %275 = vsyncpa [#allocation4], 1

</llo_original>
